<compile_context>
chip_gen: v6e
topology: v6e:2x2x1
jax: 0.10.0
libtpu: 0.0.40
codegen_flags: <defaults>
</compile_context>

<pallas_src>
import jax
import jax.numpy as jnp
from jax.experimental import pallas as pl
from jax.experimental.pallas import tpu as pltpu

LANES = 128
MAX_BLOCK_ROWS = 2048          # (2048, 128) f32 = 1 MiB per VMEM buffer


# ----------------------------- Pallas kernel --------------------------------

def _make_act_kernel(activation, alpha):
    """Elementwise activation kernel on a (block_rows, 128) VMEM tile."""
    def kernel(x_ref, o_ref):
        x = x_ref[...]
        if activation == 'lk_relu':
            y = jnp.where(x > 0, x, alpha * x)
        elif activation == 'relu':
            y = jnp.maximum(x, jnp.zeros_like(x))
        elif activation == 'sigmoid':
            y = jax.nn.sigmoid(x)
        elif activation == 'tanh':
            y = jnp.tanh(x)
        else:                                   # passthrough (shouldn't hit)
            y = x
        o_ref[...] = y
    return kernel


# ------------------------------- wrapper -------------------------------------

def activation_layer(x, activation='lk_relu', alpha_relu=0.15):
    """ActivationLayer.forward(x)."""
    if activation is None or activation not in (
            'lk_relu', 'relu', 'sigmoid', 'tanh'):
        if activation in ('softmax', 'selu'):
            # TODO(synk): softmax/selu variants not implemented in Pallas.
            raise NotImplementedError(activation)
        return x                                 # self.activation is None

    orig_shape = x.shape
    orig_dtype = x.dtype
    total = x.size

    # Flatten and pad to a lane-dense (rows, 128) layout.
    rows = -(-total // LANES)
    rows = -(-rows // 8) * 8                     # sublane-align
    block_rows = min(rows, MAX_BLOCK_ROWS)
    rows = -(-rows // block_rows) * block_rows   # grid-align
    padded = rows * LANES

    flat = jnp.ravel(x)
    if padded != total:
        flat = jnp.pad(flat, (0, padded - total))
    x2d = flat.reshape(rows, LANES)

    grid = (rows // block_rows,)
    out2d = pl.pallas_call(
        _make_act_kernel(activation, alpha_relu),
        out_shape=jax.ShapeDtypeStruct((rows, LANES), orig_dtype),
        grid=grid,
        in_specs=[pl.BlockSpec((block_rows, LANES), lambda i: (i, 0))],
        out_specs=pl.BlockSpec((block_rows, LANES), lambda i: (i, 0)),
        compiler_params=pltpu.CompilerParams(
            dimension_semantics=("parallel",)),
    )(x2d)

    return out2d.reshape(padded)[:total].reshape(orig_shape)


# --------------------------- pure-JAX reference ------------------------------

def ref_activation_layer(x, activation='lk_relu', alpha_relu=0.15):
    if activation == 'lk_relu':
        return jnp.where(x > 0, x, alpha_relu * x)
    if activation == 'relu':
        return jnp.maximum(x, 0)
    if activation == 'sigmoid':
        return jax.nn.sigmoid(x)
    if activation == 'tanh':
        return jnp.tanh(x)
    return x


# ----------------------------------- main ------------------------------------

if __name__ == "__main__":
    key = jax.random.PRNGKey(0)
    x = jax.random.normal(key, (2, 4, 16, 16), jnp.float32)   # NCHW-style input

    # Default ActivationLayer: LeakyReLU(0.15)
    out = jax.block_until_ready(activation_layer(x, 'lk_relu', 0.15))
    ref = ref_activation_layer(x, 'lk_relu', 0.15)
    assert out.shape == x.shape, out.shape
    assert jnp.allclose(out, ref, atol=1e-6, rtol=1e-6), float(
        jnp.max(jnp.abs(out - ref)))

    # Exercise the other supported variants on the same input.
    for act in ('relu', 'sigmoid', 'tanh'):
        o = jax.block_until_ready(activation_layer(x, act))
        r = ref_activation_layer(x, act)
        assert jnp.allclose(o, r, atol=1e-6, rtol=1e-6), act

    print("KERNEL_OK")
</pallas_src>

<mosaic_0001>
module attributes {stable_mosaic.version = 11 : i64} {
  func.func @kernel(%arg0: i32, %arg1: memref<16x128xf32, #tpu.memory_space<vmem>>, %arg2: memref<16x128xf32, #tpu.memory_space<vmem>>) attributes {dimension_semantics = [#tpu.dimension_semantics<parallel>], iteration_bounds = array<i64: 1>, scalar_prefetch = 0 : i64, scratch_operands = 0 : i64, tpu.core_type = #tpu.core_type<tc>, window_params = [{transform_indices = @transform_0, window_bounds = array<i64: 16, 128>}, {transform_indices = @transform_1, window_bounds = array<i64: 16, 128>}]} {
    %c0 = arith.constant 0 : index
    %c0_0 = arith.constant 0 : index
    %0 = vector.load %arg1[%c0, %c0_0] : memref<16x128xf32, #tpu.memory_space<vmem>>, vector<16x128xf32>
    %cst = arith.constant 0.000000e+00 : f32
    %1 = vector.broadcast %cst : f32 to vector<16x128xf32>
    %2 = arith.cmpf ogt, %0, %1 : vector<16x128xf32>
    %cst_1 = arith.constant 1.500000e-01 : f32
    %3 = vector.broadcast %cst_1 : f32 to vector<16x128xf32>
    %4 = arith.mulf %3, %0 : vector<16x128xf32>
    %5 = arith.select %2, %0, %4 : vector<16x128xi1>, vector<16x128xf32>
    %c0_2 = arith.constant 0 : index
    %c0_3 = arith.constant 0 : index
    %6 = vector.load %arg2[%c0_2, %c0_3] : memref<16x128xf32, #tpu.memory_space<vmem>>, vector<16x128xf32>
    tpu.vector_store %arg2[%c0_2, %c0_3], %5 {strides = array<i32>} : memref<16x128xf32, #tpu.memory_space<vmem>>, vector<16x128xf32>,
    return
  }
  func.func @transform_0(%arg0: i32) -> (i32, i32) {
    %c0_i32 = arith.constant 0 : i32
    %c0_i32_0 = arith.constant 0 : i32
    return %arg0, %c0_i32 : i32, i32
  }
  func.func @transform_1(%arg0: i32) -> (i32, i32) {
    %c0_i32 = arith.constant 0 : i32
    %c0_i32_0 = arith.constant 0 : i32
    return %arg0, %c0_i32 : i32, i32
  }
}

</mosaic_0001>

<llo_original>
// kernel: tpu_custom_call.1
$region0: #{tpu_custom_call.1}
  #allocation0 [shape = 'u32[]', space=smem, size = 0x4, offset = 0x4, fixed_abs, tag = 'smem constant byte address 0x4 - core index']
  #allocation1 [shape = 'u32[144,128]{1,0:T(1,128)}', space=vmem, size = 0x12000, scoped, tag = 'internal scratch']
  %s0 = inlined_call_operand.hbm [shape: f32[16,128], index: 0, kind: input, shape index: {}]
  %s1 = inlined_call_operand.hbm [shape: f32[16,128], index: 1, kind: output, shape index: {}]
  %s2 = sld [smem:[#allocation0]]
  $region18: #{tpu_custom_call.1} parent=0
    _
  %s4 = ssub.s32 1, %s2
  %s5 = scalar_select 0, %s4, %s2
  $region1: #{tpu_custom_call.1} parent=0
    #allocation2 [shape = 'u8[8192]{0}', space=vmem, size = 0x2000, scoped, tag = 'input window, operand 0, single buffered']
    #allocation3 [shape = 's32[1]{0}', space=sflag, size = 0x4, scoped, tag = 'scoped memory for tpu_custom_call.1']
    #allocation4 [shape = 's32[1]{0}', space=sflag, size = 0x4, scoped, tag = 'scoped memory for tpu_custom_call.1']
    #allocation5 [shape = 'u8[8192]{0}', space=vmem, size = 0x2000, scoped, tag = 'output window, operand 0, single buffered']
    %6 = vsyncpa [#allocation3], 0
    %7 = vsyncpa [#allocation4], 0
    // Predicated region
    $region2: #{tpu_custom_call.1} parent=1 // pred_check
      _
    $region3: #{tpu_custom_call.1} parent=1 // pred_check_branch
      %9 = sbr.rel (0) target = $region5
    $region4: #{tpu_custom_call.1} parent=1 // pred_region
      %s11 = ssub.s32 256, 256
      %12 = vsyncadd [#allocation3], %s11
      %s13 = sshll.u32 [#allocation2], 4
      %s14 = int_to_ptr.vmem [resolvable:$true] %s13
      %19 = dma.hbm_to_vmem [thread:$0]  %s0, 256, %s14, [#allocation3], 128, 128, 8
    $region5: #{tpu_custom_call.1} parent=1 // pred_fallthru
      _
    // Predicated region
    $region6: #{tpu_custom_call.1} parent=1 // pred_check
      _
    $region7: #{tpu_custom_call.1} parent=1 // pred_check_branch
      %21 = sbr.rel (0) target = $region9
    $region8: #{tpu_custom_call.1} parent=1 // pred_region
      %22 = dma.done [#allocation3], 256
    $region9: #{tpu_custom_call.1} parent=1 // pred_fallthru
      _
    %v23 = vld [vmem:[#allocation2] sm:$0xff]
    %v24 = vld [vmem:[#allocation2 + $0x8] sm:$0xff]
    %vm25 = vcmp.gt.f32.partialorder %v23, 0.0
    %vm26 = vcmp.gt.f32.partialorder %v24, 0.0
    %v27 = vmul.f32 %v23, 0.15
    %v28 = vmul.f32 %v24, 0.15
    %v29 = vsel %vm25, %v23, %v27
    %v30 = vsel %vm26, %v24, %v28
    %31 = vst [vmem:[#allocation5] sm:$0xff] %v29
    %32 = vst [vmem:[#allocation5 + $0x8] sm:$0xff] %v30
    // Predicated region
    $region10: #{tpu_custom_call.1} parent=1 // pred_check
      _
    $region11: #{tpu_custom_call.1} parent=1 // pred_check_branch
      %34 = sbr.rel (0) target = $region13
    $region12: #{tpu_custom_call.1} parent=1 // pred_region
      %s36 = ssub.s32 256, 256
      %37 = vsyncadd [#allocation4], %s36
      %s38 = sshll.u32 [#allocation5], 4
      %s39 = int_to_ptr.vmem [resolvable:$true] %s38
      %44 = dma.vmem_to_hbm [thread:$0]  %s39, 256, %s1, [#allocation4], 128, 128, 8
    $region13: #{tpu_custom_call.1} parent=1 // pred_fallthru
      _
    // Predicated region
    $region14: #{tpu_custom_call.1} parent=1 // pred_check
      _
    $region15: #{tpu_custom_call.1} parent=1 // pred_check_branch
      %46 = sbr.rel (0) target = $region17
    $region16: #{tpu_custom_call.1} parent=1 // pred_region
      %47 = dma.done [#allocation4], 256
    $region17: #{tpu_custom_call.1} parent=1 // pred_fallthru
      _
    %48 = vsyncpa [#allocation3], 1
    %49 = vsyncpa [#allocation4], 1

</llo_original>
